<compile_context>
chip_gen: v6e
topology: v6e:2x2x1
jax: 0.10.0
libtpu: 0.0.40
codegen_flags: <defaults>
</compile_context>

<pallas_src>
import jax
import jax.numpy as jnp
from jax.experimental import pallas as pl
from jax.experimental.pallas import tpu as pltpu

NEG_SLOPE = 0.01   # F.leaky_relu default negative_slope
LANE = 128         # vreg lane width
SUBLANE = 8        # vreg sublane count


def _round_up(x, m):
    return ((x + m - 1) // m) * m


def _fused_mlp_kernel(x_ref, *rest):
    """Fused bias-free MLP: chained MXU matmuls + f32 leaky_relu, one store.

    rest = (*w_refs, o_ref). Intermediates stay in registers / compiler-managed
    VMEM scratch; nothing intermediate is written to HBM.
    """
    o_ref = rest[-1]
    w_refs = rest[:-1]
    cdt = w_refs[0].dtype          # matmul input dtype (bf16 by default)

    h = x_ref[...].astype(jnp.float32)
    for w_ref in w_refs[:-1]:
        h = jnp.dot(h.astype(cdt), w_ref[...],
                    preferred_element_type=jnp.float32)
        # leaky_relu kept in f32 (v5e VPU has no bf16; exact on all chips).
        h = jnp.where(h > 0, h, NEG_SLOPE * h)
    h = jnp.dot(h.astype(cdt), w_refs[-1][...],
                preferred_element_type=jnp.float32)
    o_ref[...] = h.astype(o_ref.dtype)


def prepare_weights(weights, dtype=jnp.bfloat16):
    """One-time weight preparation (hoisted out of the per-forward path).

    * Hidden (inner) dims are zero-padded to multiples of 128 so intermediate
      matmuls are lane-dense; the first layer's K and the last layer's N stay
      unpadded so the kernel I/O blocks match the real input/output widths.
    * Cast to bf16: v6e/v7x MXUs are bf16-native (~2-3x f32 throughput) and it
      halves resident weight VMEM and weight HBM reads; accumulation stays f32.
    * jnp.pad guarantees exact zeros in padded rows/cols, which is what keeps
      the padded lanes zero through the whole leaky_relu / matmul chain.
    """
    n = len(weights)
    prepared = []
    for i, w in enumerate(weights):
        k, m = w.shape
        k_pad = k if i == 0 else _round_up(k, LANE)
        m_pad = m if i == n - 1 else _round_up(m, LANE)
        wp = jnp.asarray(w, jnp.float32)
        if (k_pad, m_pad) != (k, m):
            wp = jnp.pad(wp, ((0, k_pad - k), (0, m_pad - m)))
        prepared.append(wp.astype(dtype))
    return prepared


def ann_forward(x, prepared_weights, *, block_batch=512):
    """Equivalent of ANN.forward: leaky_relu on all layers except the last.

    x:                 (B, size[0]) float array
    prepared_weights:  output of prepare_weights() (pre-padded / pre-cast)
    returns            (B, size[-1]) float32
    """
    B, K = x.shape
    assert K == prepared_weights[0].shape[0], "weight chain mismatch"
    n_out = prepared_weights[-1].shape[1]
    feat_dims = [K] + [w.shape[1] for w in prepared_weights]

    # Balanced batch tiling (avoids round_up(B, block_batch) tail blowup);
    # use >=2 programs when B allows so "parallel" can engage v7x's 2nd TC.
    n_tiles = max(pl.cdiv(B, block_batch), 1)
    if n_tiles == 1 and B >= 2 * SUBLANE:
        n_tiles = 2
    tb = _round_up(pl.cdiv(B, n_tiles), SUBLANE)
    b_pad = _round_up(B, tb)
    grid = (b_pad // tb,)

    xp = jnp.asarray(x, jnp.float32)
    if b_pad != B:
        xp = jnp.pad(xp, ((0, b_pad - B), (0, 0)))

    # Explicit VMEM budget: resident weights (x2 in case they end up
    # double-buffered) + double-buffered x/out blocks + intermediate staging
    # (Mosaic stages (tb, hidden) f32 intermediates in VMEM), + headroom.
    w_bytes = sum(int(w.size) * w.dtype.itemsize for w in prepared_weights)
    io_bytes = 2 * tb * (K + n_out) * 4
    scratch_bytes = 2 * tb * max(feat_dims) * 4
    budget = int(1.25 * (2 * w_bytes + io_bytes + scratch_bytes)) + (4 << 20)
    vmem_limit = min(max(budget, 16 << 20), 64 << 20)

    out_shape = jax.ShapeDtypeStruct((b_pad, n_out), jnp.float32)
    x_spec = pl.BlockSpec((tb, K), lambda i: (i, 0))
    out_spec = pl.BlockSpec((tb, n_out), lambda i: (i, 0))

    def make_call(single_buffer_weights):
        w_specs = []
        for w in prepared_weights:
            kwargs = {}
            if single_buffer_weights:
                # Constant index_map -> fetched once; no need to double-buffer.
                kwargs["pipeline_mode"] = pl.Buffered(1)
            w_specs.append(pl.BlockSpec(w.shape, lambda i: (0, 0), **kwargs))
        return pl.pallas_call(
            _fused_mlp_kernel,
            out_shape=out_shape,
            grid=grid,
            in_specs=[x_spec] + w_specs,
            out_specs=out_spec,
            compiler_params=pltpu.CompilerParams(
                dimension_semantics=("parallel",),
                vmem_limit_bytes=vmem_limit,
            ),
        )

    try:
        out = make_call(True)(xp, *prepared_weights)
    except Exception:
        # TODO(synk): pl.Buffered(1) single-buffering of the resident weights
        # is a VMEM-only optimization; fall back to default double buffering
        # if this jax build rejects buffer_count=1.
        out = make_call(False)(xp, *prepared_weights)

    return out if b_pad == B else out[:B]


def init_ann_params(key, size):
    """Deterministic init of bias-free Linear weights.

    PyTorch stores weight as (out, in); we store the transpose (in, out).
    Uses uniform(-1/sqrt(fan_in), 1/sqrt(fan_in)) like nn.Linear's default.
    """
    weights = []
    for i in range(1, len(size)):
        key, sub = jax.random.split(key)
        fan_in = size[i - 1]
        bound = 1.0 / jnp.sqrt(jnp.float32(fan_in))
        w = jax.random.uniform(
            sub, (size[i - 1], size[i]), dtype=jnp.float32,
            minval=-bound, maxval=bound,
        )
        weights.append(w)
    return weights


def ann_forward_ref(x, weights, compute_dtype=jnp.bfloat16):
    """Pure-JAX reference mirroring the kernel's dtype path (bf16 dots,
    f32 accumulation, f32 leaky_relu)."""
    h = jnp.asarray(x, jnp.float32)
    for w in weights[:-1]:
        y = jnp.dot(h.astype(compute_dtype), jnp.asarray(w, compute_dtype),
                    preferred_element_type=jnp.float32)
        h = jnp.where(y > 0, y, NEG_SLOPE * y)
    return jnp.dot(h.astype(compute_dtype),
                   jnp.asarray(weights[-1], compute_dtype),
                   preferred_element_type=jnp.float32)


if __name__ == "__main__":
    # size == the `size` list in ANN.__init__; x has shape (batch, size[0]).
    size = (32, 64, 64, 16)
    batch = 8

    key = jax.random.PRNGKey(0)
    key, xkey = jax.random.split(key)
    x = jax.random.normal(xkey, (batch, size[0]), dtype=jnp.float32)
    weights = init_ann_params(key, size)

    prepared = prepare_weights(weights)          # one-time pad + bf16 cast
    out = jax.block_until_ready(ann_forward(x, prepared))

    ref = ann_forward_ref(x, weights)
    assert out.shape == (batch, size[-1])
    assert jnp.allclose(out, ref, atol=1e-2, rtol=1e-2), (
        "max abs diff = %f" % float(jnp.max(jnp.abs(out - ref))))
    print("KERNEL_OK")
</pallas_src>

<mosaic_0001>
module attributes {stable_mosaic.version = 11 : i64} {
  func.func @_fused_mlp_kernel(%arg0: i32, %arg1: memref<8x32xf32, #tpu.memory_space<vmem>>, %arg2: memref<32x128xbf16, #tpu.memory_space<vmem>>, %arg3: memref<128x128xbf16, #tpu.memory_space<vmem>>, %arg4: memref<128x16xbf16, #tpu.memory_space<vmem>>, %arg5: memref<8x16xf32, #tpu.memory_space<vmem>>) attributes {dimension_semantics = [#tpu.dimension_semantics<parallel>], iteration_bounds = array<i64: 1>, scalar_prefetch = 0 : i64, scratch_operands = 0 : i64, tpu.core_type = #tpu.core_type<tc>, window_params = [{transform_indices = @transform_0, window_bounds = array<i64: 8, 32>}, {pipeline_mode = #tpu.pipeline_mode<synchronous>, transform_indices = @transform_1, window_bounds = array<i64: 32, 128>}, {pipeline_mode = #tpu.pipeline_mode<synchronous>, transform_indices = @transform_2, window_bounds = array<i64: 128, 128>}, {pipeline_mode = #tpu.pipeline_mode<synchronous>, transform_indices = @transform_3, window_bounds = array<i64: 128, 16>}, {transform_indices = @transform_4, window_bounds = array<i64: 8, 16>}]} {
    %c0 = arith.constant 0 : index
    %c0_0 = arith.constant 0 : index
    %0 = vector.load %arg1[%c0, %c0_0] : memref<8x32xf32, #tpu.memory_space<vmem>>, vector<8x32xf32>
    %1 = arith.truncf %0 : vector<8x32xf32> to vector<8x32xbf16>
    %c0_1 = arith.constant 0 : index
    %c0_2 = arith.constant 0 : index
    %2 = vector.load %arg2[%c0_1, %c0_2] : memref<32x128xbf16, #tpu.memory_space<vmem>>, vector<32x128xbf16>
    %cst = arith.constant dense<0.000000e+00> : vector<8x128xf32>
    %3 = tpu.matmul %1, %2, %cst {dimension_numbers = #tpu.dot_dimension_numbers<[1], [0], [0], [1], [0, 0, 1, 1], [], []>} : vector<8x32xbf16>, vector<32x128xbf16>, vector<8x128xf32> -> vector<8x128xf32>
    %cst_3 = arith.constant 0.000000e+00 : f32
    %4 = vector.broadcast %cst_3 : f32 to vector<8x128xf32>
    %5 = arith.cmpf ogt, %3, %4 : vector<8x128xf32>
    %cst_4 = arith.constant 0.00999999977 : f32
    %6 = vector.broadcast %cst_4 : f32 to vector<8x128xf32>
    %7 = arith.mulf %6, %3 : vector<8x128xf32>
    %8 = arith.select %5, %3, %7 : vector<8x128xi1>, vector<8x128xf32>
    %9 = arith.truncf %8 : vector<8x128xf32> to vector<8x128xbf16>
    %c0_5 = arith.constant 0 : index
    %c0_6 = arith.constant 0 : index
    %10 = vector.load %arg3[%c0_5, %c0_6] : memref<128x128xbf16, #tpu.memory_space<vmem>>, vector<128x128xbf16>
    %cst_7 = arith.constant dense<0.000000e+00> : vector<8x128xf32>
    %11 = tpu.matmul %9, %10, %cst_7 {dimension_numbers = #tpu.dot_dimension_numbers<[1], [0], [0], [1], [0, 0, 1, 1], [], []>} : vector<8x128xbf16>, vector<128x128xbf16>, vector<8x128xf32> -> vector<8x128xf32>
    %cst_8 = arith.constant 0.000000e+00 : f32
    %12 = vector.broadcast %cst_8 : f32 to vector<8x128xf32>
    %13 = arith.cmpf ogt, %11, %12 : vector<8x128xf32>
    %cst_9 = arith.constant 0.00999999977 : f32
    %14 = vector.broadcast %cst_9 : f32 to vector<8x128xf32>
    %15 = arith.mulf %14, %11 : vector<8x128xf32>
    %16 = arith.select %13, %11, %15 : vector<8x128xi1>, vector<8x128xf32>
    %17 = arith.truncf %16 : vector<8x128xf32> to vector<8x128xbf16>
    %c0_10 = arith.constant 0 : index
    %c0_11 = arith.constant 0 : index
    %18 = vector.load %arg4[%c0_10, %c0_11] : memref<128x16xbf16, #tpu.memory_space<vmem>>, vector<128x16xbf16>
    %cst_12 = arith.constant dense<0.000000e+00> : vector<8x16xf32>
    %19 = tpu.matmul %17, %18, %cst_12 {dimension_numbers = #tpu.dot_dimension_numbers<[1], [0], [0], [1], [0, 0, 1, 1], [], []>} : vector<8x128xbf16>, vector<128x16xbf16>, vector<8x16xf32> -> vector<8x16xf32>
    %c0_13 = arith.constant 0 : index
    %c0_14 = arith.constant 0 : index
    %20 = vector.load %arg5[%c0_13, %c0_14] : memref<8x16xf32, #tpu.memory_space<vmem>>, vector<8x16xf32>
    tpu.vector_store %arg5[%c0_13, %c0_14], %19 {strides = array<i32>} : memref<8x16xf32, #tpu.memory_space<vmem>>, vector<8x16xf32>,
    return
  }
  func.func @transform_0(%arg0: i32) -> (i32, i32) {
    %c0_i32 = arith.constant 0 : i32
    %c0_i32_0 = arith.constant 0 : i32
    return %arg0, %c0_i32 : i32, i32
  }
  func.func @transform_1(%arg0: i32) -> (i32, i32) {
    %c0_i32 = arith.constant 0 : i32
    %c0_i32_0 = arith.constant 0 : i32
    %c0_i32_1 = arith.constant 0 : i32
    return %c0_i32, %c0_i32_0 : i32, i32
  }
  func.func @transform_2(%arg0: i32) -> (i32, i32) {
    %c0_i32 = arith.constant 0 : i32
    %c0_i32_0 = arith.constant 0 : i32
    %c0_i32_1 = arith.constant 0 : i32
    return %c0_i32, %c0_i32_0 : i32, i32
  }
  func.func @transform_3(%arg0: i32) -> (i32, i32) {
    %c0_i32 = arith.constant 0 : i32
    %c0_i32_0 = arith.constant 0 : i32
    %c0_i32_1 = arith.constant 0 : i32
    return %c0_i32, %c0_i32_0 : i32, i32
  }
  func.func @transform_4(%arg0: i32) -> (i32, i32) {
    %c0_i32 = arith.constant 0 : i32
    %c0_i32_0 = arith.constant 0 : i32
    return %arg0, %c0_i32 : i32, i32
  }
}

module attributes {stable_mosaic.version = 11 : i64} {
  func.func @_fused_mlp_kernel(%arg0: i32, %arg1: memref<8x32xf32, #tpu.memory_space<vmem>>, %arg2: memref<32x128xbf16, #tpu.memory_space<vmem>>, %arg3: memref<128x128xbf16, #tpu.memory_space<vmem>>, %arg4: memref<128x16xbf16, #tpu.memory_space<vmem>>, %arg5: memref<8x16xf32, #tpu.memory_space<vmem>>) attributes {dimension_semantics = [#tpu.dimension_semantics<parallel>], iteration_bounds = array<i64: 1>, scalar_prefetch = 0 : i64, scratch_operands = 0 : i64, tpu.core_type = #tpu.core_type<tc>, window_params = [{transform_indices = @transform_0, window_bounds = array<i64: 8, 32>}, {pipeline_mode = #tpu.pipeline_mode<synchronous>, transform_indices = @transform_1, window_bounds = array<i64: 32, 128>}, {pipeline_mode = #tpu.pipeline_mode<synchronous>, transform_indices = @transform_2, window_bounds = array<i64: 128, 128>}, {pipeline_mode = #tpu.pipeline_mode<synchronous>, transform_indices = @transform_3, window_bounds = array<i64: 128, 16>}, {transform_indices = @transform_4, window_bounds = array<i64: 8, 16>}]} {
    %c0 = arith.constant 0 : index
    %c0_0 = arith.constant 0 : index
    %0 = vector.load %arg1[%c0, %c0_0] : memref<8x32xf32, #tpu.memory_space<vmem>>, vector<8x32xf32>
    %1 = arith.truncf %0 : vector<8x32xf32> to vector<8x32xbf16>
    %c0_1 = arith.constant 0 : index
    %c0_2 = arith.constant 0 : index
    %2 = vector.load %arg2[%c0_1, %c0_2] : memref<32x128xbf16, #tpu.memory_space<vmem>>, vector<32x128xbf16>
    %cst = arith.constant dense<0.000000e+00> : vector<8x128xf32>
    %3 = tpu.matmul %1, %2, %cst {dimension_numbers = #tpu.dot_dimension_numbers<[1], [0], [0], [1], [0, 0, 1, 1], [], []>} : vector<8x32xbf16>, vector<32x128xbf16>, vector<8x128xf32> -> vector<8x128xf32>
    %cst_3 = arith.constant 0.000000e+00 : f32
    %4 = vector.broadcast %cst_3 : f32 to vector<8x128xf32>
    %5 = arith.cmpf ogt, %3, %4 : vector<8x128xf32>
    %cst_4 = arith.constant 0.00999999977 : f32
    %6 = vector.broadcast %cst_4 : f32 to vector<8x128xf32>
    %7 = arith.mulf %6, %3 : vector<8x128xf32>
    %8 = arith.select %5, %3, %7 : vector<8x128xi1>, vector<8x128xf32>
    %9 = arith.truncf %8 : vector<8x128xf32> to vector<8x128xbf16>
    %c0_5 = arith.constant 0 : index
    %c0_6 = arith.constant 0 : index
    %10 = vector.load %arg3[%c0_5, %c0_6] : memref<128x128xbf16, #tpu.memory_space<vmem>>, vector<128x128xbf16>
    %cst_7 = arith.constant dense<0.000000e+00> : vector<8x128xf32>
    %11 = tpu.matmul %9, %10, %cst_7 {dimension_numbers = #tpu.dot_dimension_numbers<[1], [0], [0], [1], [0, 0, 1, 1], [], []>} : vector<8x128xbf16>, vector<128x128xbf16>, vector<8x128xf32> -> vector<8x128xf32>
    %cst_8 = arith.constant 0.000000e+00 : f32
    %12 = vector.broadcast %cst_8 : f32 to vector<8x128xf32>
    %13 = arith.cmpf ogt, %11, %12 : vector<8x128xf32>
    %cst_9 = arith.constant 0.00999999977 : f32
    %14 = vector.broadcast %cst_9 : f32 to vector<8x128xf32>
    %15 = arith.mulf %14, %11 : vector<8x128xf32>
    %16 = arith.select %13, %11, %15 : vector<8x128xi1>, vector<8x128xf32>
    %17 = arith.truncf %16 : vector<8x128xf32> to vector<8x128xbf16>
    %c0_10 = arith.constant 0 : index
    %c0_11 = arith.constant 0 : index
    %18 = vector.load %arg4[%c0_10, %c0_11] : memref<128x16xbf16, #tpu.memory_space<vmem>>, vector<128x16xbf16>
    %cst_12 = arith.constant dense<0.000000e+00> : vector<8x16xf32>
    %19 = tpu.matmul %17, %18, %cst_12 {dimension_numbers = #tpu.dot_dimension_numbers<[1], [0], [0], [1], [0, 0, 1, 1], [], []>} : vector<8x128xbf16>, vector<128x16xbf16>, vector<8x16xf32> -> vector<8x16xf32>
    %c0_13 = arith.constant 0 : index
    %c0_14 = arith.constant 0 : index
    %20 = vector.load %arg5[%c0_13, %c0_14] : memref<8x16xf32, #tpu.memory_space<vmem>>, vector<8x16xf32>
    tpu.vector_store %arg5[%c0_13, %c0_14], %19 {strides = array<i32>} : memref<8x16xf32, #tpu.memory_space<vmem>>, vector<8x16xf32>,
    return
  }
  func.func @transform_0(%arg0: i32) -> (i32, i32) {
    %c0_i32 = arith.constant 0 : i32
    %c0_i32_0 = arith.constant 0 : i32
    return %arg0, %c0_i32 : i32, i32
  }
  func.func @transform_1(%arg0: i32) -> (i32, i32) {
    %c0_i32 = arith.constant 0 : i32
    %c0_i32_0 = arith.constant 0 : i32
    %c0_i32_1 = arith.constant 0 : i32
    return %c0_i32, %c0_i32_0 : i32, i32
  }
  func.func @transform_2(%arg0: i32) -> (i32, i32) {
    %c0_i32 = arith.constant 0 : i32
    %c0_i32_0 = arith.constant 0 : i32
    %c0_i32_1 = arith.constant 0 : i32
    return %c0_i32, %c0_i32_0 : i32, i32
  }
  func.func @transform_3(%arg0: i32) -> (i32, i32) {
    %c0_i32 = arith.constant 0 : i32
    %c0_i32_0 = arith.constant 0 : i32
    %c0_i32_1 = arith.constant 0 : i32
    return %c0_i32, %c0_i32_0 : i32, i32
  }
  func.func @transform_4(%arg0: i32) -> (i32, i32) {
    %c0_i32 = arith.constant 0 : i32
    %c0_i32_0 = arith.constant 0 : i32
    return %arg0, %c0_i32 : i32, i32
  }
}

</mosaic_0001>

<llo_original>
// kernel: tpu_custom_call.1
$region0: #{tpu_custom_call.1}
  #allocation0 [shape = 'u32[]', space=smem, size = 0x4, offset = 0x4, fixed_abs, tag = 'smem constant byte address 0x4 - core index']
  #allocation1 [shape = 'u32[144,128]{1,0:T(1,128)}', space=vmem, size = 0x12000, scoped, tag = 'internal scratch']
  %s0 = inlined_call_operand.vmem [shape: f32[8,32], index: 0, kind: input, shape index: {}]
  %s1 = inlined_call_operand.hbm [shape: bf16[32,128], index: 1, kind: input, shape index: {}]
  %s2 = inlined_call_operand.vmem [shape: bf16[128,128], index: 2, kind: input, shape index: {}]
  %s3 = inlined_call_operand.vmem [shape: bf16[128,16], index: 3, kind: input, shape index: {}]
  %s4 = inlined_call_operand.hbm [shape: f32[8,16], index: 4, kind: output, shape index: {}]
  %s5 = sld [smem:[#allocation0]]
  $region30: #{tpu_custom_call.1} parent=0
    _
  %s7 = ssub.s32 1, %s5
  %s8 = scalar_select 0, %s7, %s5
  $region1: #{tpu_custom_call.1} parent=0
    #allocation2 [shape = 'u8[8192]{0}', space=vmem, size = 0x2000, scoped, tag = 'input window, operand 1, single buffered']
    #allocation3 [shape = 's32[1]{0}', space=sflag, size = 0x4, scoped, tag = 'scoped memory for tpu_custom_call.1']
    #allocation4 [shape = 's32[1]{0}', space=sflag, size = 0x4, scoped, tag = 'scoped memory for tpu_custom_call.1']
    #allocation5 [shape = 'u8[4096]{0}', space=vmem, size = 0x1000, scoped, tag = 'output window, operand 0, single buffered']
    %9 = vsyncpa [#allocation3], 0
    %10 = vsyncpa [#allocation4], 0
    // Predicated region
    $region2: #{tpu_custom_call.1} parent=1 // pred_check
      _
    $region3: #{tpu_custom_call.1} parent=1 // pred_check_branch
      %12 = sbr.rel (0) target = $region5
    $region4: #{tpu_custom_call.1} parent=1 // pred_region
      _
    $region5: #{tpu_custom_call.1} parent=1 // pred_fallthru
      _
    // Predicated region
    $region6: #{tpu_custom_call.1} parent=1 // pred_check
      _
    $region7: #{tpu_custom_call.1} parent=1 // pred_check_branch
      %14 = sbr.rel (0) target = $region9
    $region8: #{tpu_custom_call.1} parent=1 // pred_region
      %s16 = ssub.s32 256, 256
      %17 = vsyncadd [#allocation3], %s16
      %s18 = sshll.u32 [#allocation2], 4
      %s19 = int_to_ptr.vmem [resolvable:$true] %s18
      %24 = dma.hbm_to_vmem [thread:$0]  %s1, 256, %s19, [#allocation3], 64, 64, 4
    $region9: #{tpu_custom_call.1} parent=1 // pred_fallthru
      _
    // Predicated region
    $region10: #{tpu_custom_call.1} parent=1 // pred_check
      _
    $region11: #{tpu_custom_call.1} parent=1 // pred_check_branch
      %26 = sbr.rel (0) target = $region13
    $region12: #{tpu_custom_call.1} parent=1 // pred_region
      _
    $region13: #{tpu_custom_call.1} parent=1 // pred_fallthru
      _
    // Predicated region
    $region14: #{tpu_custom_call.1} parent=1 // pred_check
      _
    $region15: #{tpu_custom_call.1} parent=1 // pred_check_branch
      %28 = sbr.rel (0) target = $region17
    $region16: #{tpu_custom_call.1} parent=1 // pred_region
      _
    $region17: #{tpu_custom_call.1} parent=1 // pred_fallthru
      _
    // Predicated region
    $region18: #{tpu_custom_call.1} parent=1 // pred_check
      _
    $region19: #{tpu_custom_call.1} parent=1 // pred_check_branch
      %30 = sbr.rel (0) target = $region21
    $region20: #{tpu_custom_call.1} parent=1 // pred_region
      %31 = dma.done [#allocation3], 256
    $region21: #{tpu_custom_call.1} parent=1 // pred_fallthru
      _
    %v33 = vld [vmem:[%s0] sm:$0xff]
    %v34 = vpack.c.bf16 %v33, %v33
    %v35 = vld [vmem:[#allocation2] sm:$0xf]
    %v36 = vld [vmem:[#allocation2 + $0x4] sm:$0xf]
    %v37 = vld [vmem:[#allocation2 + $0x8] sm:$0xf]
    %v38 = vld [vmem:[#allocation2 + $0xc] sm:$0xf]
    %v43 = vunpack.c.l.b16 %v35
    %v44 = vunpack.c.l.b16 %v36
    %v45 = vunpack.c.l.b16 %v37
    %v46 = vunpack.c.l.b16 %v38
    %v47 = vpack.c.b16 %v44, %v43
    %v48 = vpack.c.b16 %v46, %v45
    %vm51 = vcmask 261120
    %v53 = vsel %vm51, %v34, 0
    %55 = vmatprep.subr.bf16.mxu0 0
    %56 = vmatpush1.bf16.msra.mxu0 0
    %57 = vmatprep.subr.bf16.mxu0 0
    %58 = vmatpush1.bf16.msra.mxu0 0
    %59 = vmatprep.subr.bf16.mxu0 0
    %60 = vmatpush1.bf16.msra.mxu0 0
    %61 = vmatprep.subr.bf16.mxu0 0
    %62 = vmatpush1.bf16.msra.mxu0 0
    %63 = vmatprep.subr.bf16.mxu0 0
    %64 = vmatpush1.bf16.msra.mxu0 0
    %65 = vmatprep.subr.bf16.mxu0 0
    %66 = vmatpush1.bf16.msra.mxu0 0
    %67 = vmatprep.subr.bf16.mxu0 0
    %68 = vmatpush1.bf16.msra.mxu0 %v48
    %69 = vmatprep.subr.bf16.mxu0 0
    %70 = vmatpush1.bf16.msra.mxu0 %v47
    %71 = vmatprep.subr.bf16.mxu0 0
    %72 = vmatpush2.bf16.msra.mxu0 0
    %73 = vmatprep.subr.bf16.mxu0 0
    %74 = vmatpush2.bf16.msra.mxu0 0
    %75 = vmatprep.subr.bf16.mxu0 0
    %76 = vmatpush2.bf16.msra.mxu0 0
    %77 = vmatprep.subr.bf16.mxu0 0
    %78 = vmatpush2.bf16.msra.mxu0 0
    %79 = vmatprep.subr.bf16.mxu0 0
    %80 = vmatpush2.bf16.msra.mxu0 0
    %81 = vmatprep.subr.bf16.mxu0 0
    %82 = vmatpush2.bf16.msra.mxu0 0
    %83 = vmatprep.subr.bf16.mxu0 0
    %84 = vmatpush2.bf16.msra.mxu0 0
    %85 = vmatprep.subr.bf16.mxu0 0
    %86 = vmatpush2.bf16.msra.mxu0 0
    %87 = vmatprep.mubr.bf16.mxu0 0
    %88 = vmatmul.mubr.bf16.gmra.mxu0 %v53
    %v89 = vpop.f32.mrf.mxu0
    %v90 = vadd.f32 0.0, %v89
    %v91 = vpop.f32.mrf.mxu0
    %v92 = vpop.f32.mrf.mxu0
    %v93 = vpop.f32.mrf.mxu0
    %94 = vdwg.mxu0
    %vm95 = vcmp.gt.f32.partialorder %v90, 0.0
    %v96 = vmul.f32 %v90, 0.01
    %v97 = vsel %vm95, %v90, %v96
    %v98 = vpack.c.bf16 %v97, %v97
    %v99 = vld [vmem:[%s2] sm:$0xf]
    %v100 = vld [vmem:[%s2 + $0x4] sm:$0xf]
    %v101 = vld [vmem:[%s2 + $0x8] sm:$0xf]
    %v102 = vld [vmem:[%s2 + $0xc] sm:$0xf]
    %v103 = vld [vmem:[%s2 + $0x10] sm:$0xf]
    %v104 = vld [vmem:[%s2 + $0x14] sm:$0xf]
    %v105 = vld [vmem:[%s2 + $0x18] sm:$0xf]
    %v106 = vld [vmem:[%s2 + $0x1c] sm:$0xf]
    %v107 = vld [vmem:[%s2 + $0x20] sm:$0xf]
    %v108 = vld [vmem:[%s2 + $0x24] sm:$0xf]
    %v109 = vld [vmem:[%s2 + $0x28] sm:$0xf]
    %v110 = vld [vmem:[%s2 + $0x2c] sm:$0xf]
    %v111 = vld [vmem:[%s2 + $0x30] sm:$0xf]
    %v112 = vld [vmem:[%s2 + $0x34] sm:$0xf]
    %v113 = vld [vmem:[%s2 + $0x38] sm:$0xf]
    %v114 = vld [vmem:[%s2 + $0x3c] sm:$0xf]
    %v131 = vunpack.c.l.b16 %v99
    %v132 = vunpack.c.l.b16 %v100
    %v133 = vunpack.c.l.b16 %v101
    %v134 = vunpack.c.l.b16 %v102
    %v135 = vunpack.c.l.b16 %v103
    %v136 = vunpack.c.l.b16 %v104
    %v137 = vunpack.c.l.b16 %v105
    %v138 = vunpack.c.l.b16 %v106
    %v139 = vunpack.c.l.b16 %v107
    %v140 = vunpack.c.l.b16 %v108
    %v141 = vunpack.c.l.b16 %v109
    %v142 = vunpack.c.l.b16 %v110
    %v143 = vunpack.c.l.b16 %v111
    %v144 = vunpack.c.l.b16 %v112
    %v145 = vunpack.c.l.b16 %v113
    %v146 = vunpack.c.l.b16 %v114
    %v147 = vpack.c.b16 %v132, %v131
    %v148 = vpack.c.b16 %v134, %v133
    %v149 = vpack.c.b16 %v136, %v135
    %v150 = vpack.c.b16 %v138, %v137
    %v151 = vpack.c.b16 %v140, %v139
    %v152 = vpack.c.b16 %v142, %v141
    %v153 = vpack.c.b16 %v144, %v143
    %v154 = vpack.c.b16 %v146, %v145
    %163 = vmatprep.subr.bf16.mxu0 0
    %164 = vmatpush1.bf16.msra.mxu0 %v154
    %165 = vmatprep.subr.bf16.mxu0 0
    %166 = vmatpush1.bf16.msra.mxu0 %v153
    %167 = vmatprep.subr.bf16.mxu0 0
    %168 = vmatpush1.bf16.msra.mxu0 %v152
    %169 = vmatprep.subr.bf16.mxu0 0
    %170 = vmatpush1.bf16.msra.mxu0 %v151
    %171 = vmatprep.subr.bf16.mxu0 0
    %172 = vmatpush1.bf16.msra.mxu0 %v150
    %173 = vmatprep.subr.bf16.mxu0 0
    %174 = vmatpush1.bf16.msra.mxu0 %v149
    %175 = vmatprep.subr.bf16.mxu0 0
    %176 = vmatpush1.bf16.msra.mxu0 %v148
    %177 = vmatprep.subr.bf16.mxu0 0
    %178 = vmatpush1.bf16.msra.mxu0 %v147
    %179 = vmatprep.subr.bf16.mxu0 0
    %180 = vmatpush2.bf16.msra.mxu0 0
    %181 = vmatprep.subr.bf16.mxu0 0
    %182 = vmatpush2.bf16.msra.mxu0 0
    %183 = vmatprep.subr.bf16.mxu0 0
    %184 = vmatpush2.bf16.msra.mxu0 0
    %185 = vmatprep.subr.bf16.mxu0 0
    %186 = vmatpush2.bf16.msra.mxu0 0
    %187 = vmatprep.subr.bf16.mxu0 0
    %188 = vmatpush2.bf16.msra.mxu0 0
    %189 = vmatprep.subr.bf16.mxu0 0
    %190 = vmatpush2.bf16.msra.mxu0 0
    %191 = vmatprep.subr.bf16.mxu0 0
    %192 = vmatpush2.bf16.msra.mxu0 0
    %193 = vmatprep.subr.bf16.mxu0 0
    %194 = vmatpush2.bf16.msra.mxu0 0
    %195 = vmatprep.mubr.bf16.mxu0 0
    %196 = vmatmul.mubr.bf16.gmra.mxu0 %v98
    %v197 = vpop.f32.mrf.mxu0
    %v198 = vadd.f32 0.0, %v197
    %v199 = vpop.f32.mrf.mxu0
    %v200 = vpop.f32.mrf.mxu0
    %v201 = vpop.f32.mrf.mxu0
    %202 = vdwg.mxu0
    %vm203 = vcmp.gt.f32.partialorder %v198, 0.0
    %v204 = vmul.f32 %v198, 0.01
    %v205 = vsel %vm203, %v198, %v204
    %v206 = vpack.c.bf16 %v205, %v205
    %v207 = vld [vmem:[%s3] sm:$0xf]
    %v208 = vld [vmem:[%s3 + $0x4] sm:$0xf]
    %v209 = vld [vmem:[%s3 + $0x8] sm:$0xf]
    %v210 = vld [vmem:[%s3 + $0xc] sm:$0xf]
    %v211 = vld [vmem:[%s3 + $0x10] sm:$0xf]
    %v212 = vld [vmem:[%s3 + $0x14] sm:$0xf]
    %v213 = vld [vmem:[%s3 + $0x18] sm:$0xf]
    %v214 = vld [vmem:[%s3 + $0x1c] sm:$0xf]
    %v215 = vld [vmem:[%s3 + $0x20] sm:$0xf]
    %v216 = vld [vmem:[%s3 + $0x24] sm:$0xf]
    %v217 = vld [vmem:[%s3 + $0x28] sm:$0xf]
    %v218 = vld [vmem:[%s3 + $0x2c] sm:$0xf]
    %v219 = vld [vmem:[%s3 + $0x30] sm:$0xf]
    %v220 = vld [vmem:[%s3 + $0x34] sm:$0xf]
    %v221 = vld [vmem:[%s3 + $0x38] sm:$0xf]
    %v222 = vld [vmem:[%s3 + $0x3c] sm:$0xf]
    %v239 = vunpack.c.l.b16 %v207
    %v240 = vunpack.c.l.b16 %v208
    %v241 = vunpack.c.l.b16 %v209
    %v242 = vunpack.c.l.b16 %v210
    %v243 = vunpack.c.l.b16 %v211
    %v244 = vunpack.c.l.b16 %v212
    %v245 = vunpack.c.l.b16 %v213
    %v246 = vunpack.c.l.b16 %v214
    %v247 = vunpack.c.l.b16 %v215
    %v248 = vunpack.c.l.b16 %v216
    %v249 = vunpack.c.l.b16 %v217
    %v250 = vunpack.c.l.b16 %v218
    %v251 = vunpack.c.l.b16 %v219
    %v252 = vunpack.c.l.b16 %v220
    %v253 = vunpack.c.l.b16 %v221
    %v254 = vunpack.c.l.b16 %v222
    %v255 = vpack.c.b16 %v240, %v239
    %v256 = vpack.c.b16 %v242, %v241
    %v257 = vpack.c.b16 %v244, %v243
    %v258 = vpack.c.b16 %v246, %v245
    %v259 = vpack.c.b16 %v248, %v247
    %v260 = vpack.c.b16 %v250, %v249
    %v261 = vpack.c.b16 %v252, %v251
    %v262 = vpack.c.b16 %v254, %v253
    %271 = vmatprep.subr.bf16.mxu0 0
    %272 = vmatpush1.bf16.msra.mxu0 %v262
    %273 = vmatprep.subr.bf16.mxu0 0
    %274 = vmatpush1.bf16.msra.mxu0 %v261
    %275 = vmatprep.subr.bf16.mxu0 0
    %276 = vmatpush1.bf16.msra.mxu0 %v260
    %277 = vmatprep.subr.bf16.mxu0 0
    %278 = vmatpush1.bf16.msra.mxu0 %v259
    %279 = vmatprep.subr.bf16.mxu0 0
    %280 = vmatpush1.bf16.msra.mxu0 %v258
    %281 = vmatprep.subr.bf16.mxu0 0
    %282 = vmatpush1.bf16.msra.mxu0 %v257
    %283 = vmatprep.subr.bf16.mxu0 0
    %284 = vmatpush1.bf16.msra.mxu0 %v256
    %285 = vmatprep.subr.bf16.mxu0 0
    %286 = vmatpush1.bf16.msra.mxu0 %v255
    %287 = vmatprep.subr.bf16.mxu0 0
    %288 = vmatpush2.bf16.msra.mxu0 0
    %289 = vmatprep.subr.bf16.mxu0 0
    %290 = vmatpush2.bf16.msra.mxu0 0
    %291 = vmatprep.subr.bf16.mxu0 0
    %292 = vmatpush2.bf16.msra.mxu0 0
    %293 = vmatprep.subr.bf16.mxu0 0
    %294 = vmatpush2.bf16.msra.mxu0 0
    %295 = vmatprep.subr.bf16.mxu0 0
    %296 = vmatpush2.bf16.msra.mxu0 0
    %297 = vmatprep.subr.bf16.mxu0 0
    %298 = vmatpush2.bf16.msra.mxu0 0
    %299 = vmatprep.subr.bf16.mxu0 0
    %300 = vmatpush2.bf16.msra.mxu0 0
    %301 = vmatprep.subr.bf16.mxu0 0
    %302 = vmatpush2.bf16.msra.mxu0 0
    %303 = vmatprep.mubr.bf16.mxu0 0
    %304 = vmatmul.mubr.bf16.gmra.mxu0 %v206
    %v305 = vpop.f32.mrf.mxu0
    %v306 = vadd.f32 0.0, %v305
    %v307 = vpop.f32.mrf.mxu0
    %v308 = vpop.f32.mrf.mxu0
    %v309 = vpop.f32.mrf.mxu0
    %310 = vdwg.mxu0
    %vm311 = vcmask 130048
    %312 = vst.msk [vmem:[#allocation5] sm:$0xff] %vm311, %v306
    // Predicated region
    $region22: #{tpu_custom_call.1} parent=1 // pred_check
      _
    $region23: #{tpu_custom_call.1} parent=1 // pred_check_branch
      %314 = sbr.rel (0) target = $region25
    $region24: #{tpu_custom_call.1} parent=1 // pred_region
      %s316 = ssub.s32 128, 128
      %317 = vsyncadd [#allocation4], %s316
      %s319 = sshll.u32 [#allocation5], 4
      %s320 = int_to_ptr.vmem [resolvable:$true] %s319
      %322 = dma.vmem_to_hbm [thread:$0]  %s320, 128, %s4, [#allocation4]
    $region25: #{tpu_custom_call.1} parent=1 // pred_fallthru
      _
    // Predicated region
    $region26: #{tpu_custom_call.1} parent=1 // pred_check
      _
    $region27: #{tpu_custom_call.1} parent=1 // pred_check_branch
      %324 = sbr.rel (0) target = $region29
    $region28: #{tpu_custom_call.1} parent=1 // pred_region
      %325 = dma.done [#allocation4], 128
    $region29: #{tpu_custom_call.1} parent=1 // pred_fallthru
      _
    %326 = vsyncpa [#allocation3], 1
    %327 = vsyncpa [#allocation4], 1

// kernel: tpu_custom_call.1
$region0: #{tpu_custom_call.1}
  #allocation0 [shape = 'u32[]', space=smem, size = 0x4, offset = 0x4, fixed_abs, tag = 'smem constant byte address 0x4 - core index']
  #allocation1 [shape = 'u32[144,128]{1,0:T(1,128)}', space=vmem, size = 0x12000, scoped, tag = 'internal scratch']
  %s0 = inlined_call_operand.vmem [shape: f32[8,32], index: 0, kind: input, shape index: {}]
  %s1 = inlined_call_operand.hbm [shape: bf16[32,128], index: 1, kind: input, shape index: {}]
  %s2 = inlined_call_operand.vmem [shape: bf16[128,128], index: 2, kind: input, shape index: {}]
  %s3 = inlined_call_operand.vmem [shape: bf16[128,16], index: 3, kind: input, shape index: {}]
  %s4 = inlined_call_operand.hbm [shape: f32[8,16], index: 4, kind: output, shape index: {}]
  %s5 = sld [smem:[#allocation0]]
  $region30: #{tpu_custom_call.1} parent=0
    _
  %s7 = ssub.s32 1, %s5
  %s8 = scalar_select 0, %s7, %s5
  $region1: #{tpu_custom_call.1} parent=0
    #allocation2 [shape = 'u8[8192]{0}', space=vmem, size = 0x2000, scoped, tag = 'input window, operand 1, single buffered']
    #allocation3 [shape = 's32[1]{0}', space=sflag, size = 0x4, scoped, tag = 'scoped memory for tpu_custom_call.1']
    #allocation4 [shape = 's32[1]{0}', space=sflag, size = 0x4, scoped, tag = 'scoped memory for tpu_custom_call.1']
    #allocation5 [shape = 'u8[4096]{0}', space=vmem, size = 0x1000, scoped, tag = 'output window, operand 0, single buffered']
    %9 = vsyncpa [#allocation3], 0
    %10 = vsyncpa [#allocation4], 0
    // Predicated region
    $region2: #{tpu_custom_call.1} parent=1 // pred_check
      _
    $region3: #{tpu_custom_call.1} parent=1 // pred_check_branch
      %12 = sbr.rel (0) target = $region5
    $region4: #{tpu_custom_call.1} parent=1 // pred_region
      _
    $region5: #{tpu_custom_call.1} parent=1 // pred_fallthru
      _
    // Predicated region
    $region6: #{tpu_custom_call.1} parent=1 // pred_check
      _
    $region7: #{tpu_custom_call.1} parent=1 // pred_check_branch
      %14 = sbr.rel (0) target = $region9
    $region8: #{tpu_custom_call.1} parent=1 // pred_region
      %s16 = ssub.s32 256, 256
      %17 = vsyncadd [#allocation3], %s16
      %s18 = sshll.u32 [#allocation2], 4
      %s19 = int_to_ptr.vmem [resolvable:$true] %s18
      %24 = dma.hbm_to_vmem [thread:$0]  %s1, 256, %s19, [#allocation3], 64, 64, 4
    $region9: #{tpu_custom_call.1} parent=1 // pred_fallthru
      _
    // Predicated region
    $region10: #{tpu_custom_call.1} parent=1 // pred_check
      _
    $region11: #{tpu_custom_call.1} parent=1 // pred_check_branch
      %26 = sbr.rel (0) target = $region13
    $region12: #{tpu_custom_call.1} parent=1 // pred_region
      _
    $region13: #{tpu_custom_call.1} parent=1 // pred_fallthru
      _
    // Predicated region
    $region14: #{tpu_custom_call.1} parent=1 // pred_check
      _
    $region15: #{tpu_custom_call.1} parent=1 // pred_check_branch
      %28 = sbr.rel (0) target = $region17
    $region16: #{tpu_custom_call.1} parent=1 // pred_region
      _
    $region17: #{tpu_custom_call.1} parent=1 // pred_fallthru
      _
    // Predicated region
    $region18: #{tpu_custom_call.1} parent=1 // pred_check
      _
    $region19: #{tpu_custom_call.1} parent=1 // pred_check_branch
      %30 = sbr.rel (0) target = $region21
    $region20: #{tpu_custom_call.1} parent=1 // pred_region
      %31 = dma.done [#allocation3], 256
    $region21: #{tpu_custom_call.1} parent=1 // pred_fallthru
      _
    %v33 = vld [vmem:[%s0] sm:$0xff]
    %v34 = vpack.c.bf16 %v33, %v33
    %v35 = vld [vmem:[#allocation2] sm:$0xf]
    %v36 = vld [vmem:[#allocation2 + $0x4] sm:$0xf]
    %v37 = vld [vmem:[#allocation2 + $0x8] sm:$0xf]
    %v38 = vld [vmem:[#allocation2 + $0xc] sm:$0xf]
    %v43 = vunpack.c.l.b16 %v35
    %v44 = vunpack.c.l.b16 %v36
    %v45 = vunpack.c.l.b16 %v37
    %v46 = vunpack.c.l.b16 %v38
    %v47 = vpack.c.b16 %v44, %v43
    %v48 = vpack.c.b16 %v46, %v45
    %vm51 = vcmask 261120
    %v53 = vsel %vm51, %v34, 0
    %55 = vmatprep.subr.bf16.mxu0 0
    %56 = vmatpush1.bf16.msra.mxu0 0
    %57 = vmatprep.subr.bf16.mxu0 0
    %58 = vmatpush1.bf16.msra.mxu0 0
    %59 = vmatprep.subr.bf16.mxu0 0
    %60 = vmatpush1.bf16.msra.mxu0 0
    %61 = vmatprep.subr.bf16.mxu0 0
    %62 = vmatpush1.bf16.msra.mxu0 0
    %63 = vmatprep.subr.bf16.mxu0 0
    %64 = vmatpush1.bf16.msra.mxu0 0
    %65 = vmatprep.subr.bf16.mxu0 0
    %66 = vmatpush1.bf16.msra.mxu0 0
    %67 = vmatprep.subr.bf16.mxu0 0
    %68 = vmatpush1.bf16.msra.mxu0 %v48
    %69 = vmatprep.subr.bf16.mxu0 0
    %70 = vmatpush1.bf16.msra.mxu0 %v47
    %71 = vmatprep.subr.bf16.mxu0 0
    %72 = vmatpush2.bf16.msra.mxu0 0
    %73 = vmatprep.subr.bf16.mxu0 0
    %74 = vmatpush2.bf16.msra.mxu0 0
    %75 = vmatprep.subr.bf16.mxu0 0
    %76 = vmatpush2.bf16.msra.mxu0 0
    %77 = vmatprep.subr.bf16.mxu0 0
    %78 = vmatpush2.bf16.msra.mxu0 0
    %79 = vmatprep.subr.bf16.mxu0 0
    %80 = vmatpush2.bf16.msra.mxu0 0
    %81 = vmatprep.subr.bf16.mxu0 0
    %82 = vmatpush2.bf16.msra.mxu0 0
    %83 = vmatprep.subr.bf16.mxu0 0
    %84 = vmatpush2.bf16.msra.mxu0 0
    %85 = vmatprep.subr.bf16.mxu0 0
    %86 = vmatpush2.bf16.msra.mxu0 0
    %87 = vmatprep.mubr.bf16.mxu0 0
    %88 = vmatmul.mubr.bf16.gmra.mxu0 %v53
    %v89 = vpop.f32.mrf.mxu0
    %v90 = vadd.f32 0.0, %v89
    %v91 = vpop.f32.mrf.mxu0
    %v92 = vpop.f32.mrf.mxu0
    %v93 = vpop.f32.mrf.mxu0
    %94 = vdwg.mxu0
    %vm95 = vcmp.gt.f32.partialorder %v90, 0.0
    %v96 = vmul.f32 %v90, 0.01
    %v97 = vsel %vm95, %v90, %v96
    %v98 = vpack.c.bf16 %v97, %v97
    %v99 = vld [vmem:[%s2] sm:$0xf]
    %v100 = vld [vmem:[%s2 + $0x4] sm:$0xf]
    %v101 = vld [vmem:[%s2 + $0x8] sm:$0xf]
    %v102 = vld [vmem:[%s2 + $0xc] sm:$0xf]
    %v103 = vld [vmem:[%s2 + $0x10] sm:$0xf]
    %v104 = vld [vmem:[%s2 + $0x14] sm:$0xf]
    %v105 = vld [vmem:[%s2 + $0x18] sm:$0xf]
    %v106 = vld [vmem:[%s2 + $0x1c] sm:$0xf]
    %v107 = vld [vmem:[%s2 + $0x20] sm:$0xf]
    %v108 = vld [vmem:[%s2 + $0x24] sm:$0xf]
    %v109 = vld [vmem:[%s2 + $0x28] sm:$0xf]
    %v110 = vld [vmem:[%s2 + $0x2c] sm:$0xf]
    %v111 = vld [vmem:[%s2 + $0x30] sm:$0xf]
    %v112 = vld [vmem:[%s2 + $0x34] sm:$0xf]
    %v113 = vld [vmem:[%s2 + $0x38] sm:$0xf]
    %v114 = vld [vmem:[%s2 + $0x3c] sm:$0xf]
    %v131 = vunpack.c.l.b16 %v99
    %v132 = vunpack.c.l.b16 %v100
    %v133 = vunpack.c.l.b16 %v101
    %v134 = vunpack.c.l.b16 %v102
    %v135 = vunpack.c.l.b16 %v103
    %v136 = vunpack.c.l.b16 %v104
    %v137 = vunpack.c.l.b16 %v105
    %v138 = vunpack.c.l.b16 %v106
    %v139 = vunpack.c.l.b16 %v107
    %v140 = vunpack.c.l.b16 %v108
    %v141 = vunpack.c.l.b16 %v109
    %v142 = vunpack.c.l.b16 %v110
    %v143 = vunpack.c.l.b16 %v111
    %v144 = vunpack.c.l.b16 %v112
    %v145 = vunpack.c.l.b16 %v113
    %v146 = vunpack.c.l.b16 %v114
    %v147 = vpack.c.b16 %v132, %v131
    %v148 = vpack.c.b16 %v134, %v133
    %v149 = vpack.c.b16 %v136, %v135
    %v150 = vpack.c.b16 %v138, %v137
    %v151 = vpack.c.b16 %v140, %v139
    %v152 = vpack.c.b16 %v142, %v141
    %v153 = vpack.c.b16 %v144, %v143
    %v154 = vpack.c.b16 %v146, %v145
    %163 = vmatprep.subr.bf16.mxu0 0
    %164 = vmatpush1.bf16.msra.mxu0 %v154
    %165 = vmatprep.subr.bf16.mxu0 0
    %166 = vmatpush1.bf16.msra.mxu0 %v153
    %167 = vmatprep.subr.bf16.mxu0 0
    %168 = vmatpush1.bf16.msra.mxu0 %v152
    %169 = vmatprep.subr.bf16.mxu0 0
    %170 = vmatpush1.bf16.msra.mxu0 %v151
    %171 = vmatprep.subr.bf16.mxu0 0
    %172 = vmatpush1.bf16.msra.mxu0 %v150
    %173 = vmatprep.subr.bf16.mxu0 0
    %174 = vmatpush1.bf16.msra.mxu0 %v149
    %175 = vmatprep.subr.bf16.mxu0 0
    %176 = vmatpush1.bf16.msra.mxu0 %v148
    %177 = vmatprep.subr.bf16.mxu0 0
    %178 = vmatpush1.bf16.msra.mxu0 %v147
    %179 = vmatprep.subr.bf16.mxu0 0
    %180 = vmatpush2.bf16.msra.mxu0 0
    %181 = vmatprep.subr.bf16.mxu0 0
    %182 = vmatpush2.bf16.msra.mxu0 0
    %183 = vmatprep.subr.bf16.mxu0 0
    %184 = vmatpush2.bf16.msra.mxu0 0
    %185 = vmatprep.subr.bf16.mxu0 0
    %186 = vmatpush2.bf16.msra.mxu0 0
    %187 = vmatprep.subr.bf16.mxu0 0
    %188 = vmatpush2.bf16.msra.mxu0 0
    %189 = vmatprep.subr.bf16.mxu0 0
    %190 = vmatpush2.bf16.msra.mxu0 0
    %191 = vmatprep.subr.bf16.mxu0 0
    %192 = vmatpush2.bf16.msra.mxu0 0
    %193 = vmatprep.subr.bf16.mxu0 0
    %194 = vmatpush2.bf16.msra.mxu0 0
    %195 = vmatprep.mubr.bf16.mxu0 0
    %196 = vmatmul.mubr.bf16.gmra.mxu0 %v98
    %v197 = vpop.f32.mrf.mxu0
    %v198 = vadd.f32 0.0, %v197
    %v199 = vpop.f32.mrf.mxu0
    %v200 = vpop.f32.mrf.mxu0
    %v201 = vpop.f32.mrf.mxu0
    %202 = vdwg.mxu0
    %vm203 = vcmp.gt.f32.partialorder %v198, 0.0
    %v204 = vmul.f32 %v198, 0.01
    %v205 = vsel %vm203, %v198, %v204
    %v206 = vpack.c.bf16 %v205, %v205
    %v207 = vld [vmem:[%s3] sm:$0xf]
    %v208 = vld [vmem:[%s3 + $0x4] sm:$0xf]
    %v209 = vld [vmem:[%s3 + $0x8] sm:$0xf]
    %v210 = vld [vmem:[%s3 + $0xc] sm:$0xf]
    %v211 = vld [vmem:[%s3 + $0x10] sm:$0xf]
    %v212 = vld [vmem:[%s3 + $0x14] sm:$0xf]
    %v213 = vld [vmem:[%s3 + $0x18] sm:$0xf]
    %v214 = vld [vmem:[%s3 + $0x1c] sm:$0xf]
    %v215 = vld [vmem:[%s3 + $0x20] sm:$0xf]
    %v216 = vld [vmem:[%s3 + $0x24] sm:$0xf]
    %v217 = vld [vmem:[%s3 + $0x28] sm:$0xf]
    %v218 = vld [vmem:[%s3 + $0x2c] sm:$0xf]
    %v219 = vld [vmem:[%s3 + $0x30] sm:$0xf]
    %v220 = vld [vmem:[%s3 + $0x34] sm:$0xf]
    %v221 = vld [vmem:[%s3 + $0x38] sm:$0xf]
    %v222 = vld [vmem:[%s3 + $0x3c] sm:$0xf]
    %v239 = vunpack.c.l.b16 %v207
    %v240 = vunpack.c.l.b16 %v208
    %v241 = vunpack.c.l.b16 %v209
    %v242 = vunpack.c.l.b16 %v210
    %v243 = vunpack.c.l.b16 %v211
    %v244 = vunpack.c.l.b16 %v212
    %v245 = vunpack.c.l.b16 %v213
    %v246 = vunpack.c.l.b16 %v214
    %v247 = vunpack.c.l.b16 %v215
    %v248 = vunpack.c.l.b16 %v216
    %v249 = vunpack.c.l.b16 %v217
    %v250 = vunpack.c.l.b16 %v218
    %v251 = vunpack.c.l.b16 %v219
    %v252 = vunpack.c.l.b16 %v220
    %v253 = vunpack.c.l.b16 %v221
    %v254 = vunpack.c.l.b16 %v222
    %v255 = vpack.c.b16 %v240, %v239
    %v256 = vpack.c.b16 %v242, %v241
    %v257 = vpack.c.b16 %v244, %v243
    %v258 = vpack.c.b16 %v246, %v245
    %v259 = vpack.c.b16 %v248, %v247
    %v260 = vpack.c.b16 %v250, %v249
    %v261 = vpack.c.b16 %v252, %v251
    %v262 = vpack.c.b16 %v254, %v253
    %271 = vmatprep.subr.bf16.mxu0 0
    %272 = vmatpush1.bf16.msra.mxu0 %v262
    %273 = vmatprep.subr.bf16.mxu0 0
    %274 = vmatpush1.bf16.msra.mxu0 %v261
    %275 = vmatprep.subr.bf16.mxu0 0
    %276 = vmatpush1.bf16.msra.mxu0 %v260
    %277 = vmatprep.subr.bf16.mxu0 0
    %278 = vmatpush1.bf16.msra.mxu0 %v259
    %279 = vmatprep.subr.bf16.mxu0 0
    %280 = vmatpush1.bf16.msra.mxu0 %v258
    %281 = vmatprep.subr.bf16.mxu0 0
    %282 = vmatpush1.bf16.msra.mxu0 %v257
    %283 = vmatprep.subr.bf16.mxu0 0
    %284 = vmatpush1.bf16.msra.mxu0 %v256
    %285 = vmatprep.subr.bf16.mxu0 0
    %286 = vmatpush1.bf16.msra.mxu0 %v255
    %287 = vmatprep.subr.bf16.mxu0 0
    %288 = vmatpush2.bf16.msra.mxu0 0
    %289 = vmatprep.subr.bf16.mxu0 0
    %290 = vmatpush2.bf16.msra.mxu0 0
    %291 = vmatprep.subr.bf16.mxu0 0
    %292 = vmatpush2.bf16.msra.mxu0 0
    %293 = vmatprep.subr.bf16.mxu0 0
    %294 = vmatpush2.bf16.msra.mxu0 0
    %295 = vmatprep.subr.bf16.mxu0 0
    %296 = vmatpush2.bf16.msra.mxu0 0
    %297 = vmatprep.subr.bf16.mxu0 0
    %298 = vmatpush2.bf16.msra.mxu0 0
    %299 = vmatprep.subr.bf16.mxu0 0
    %300 = vmatpush2.bf16.msra.mxu0 0
    %301 = vmatprep.subr.bf16.mxu0 0
    %302 = vmatpush2.bf16.msra.mxu0 0
    %303 = vmatprep.mubr.bf16.mxu0 0
    %304 = vmatmul.mubr.bf16.gmra.mxu0 %v206
    %v305 = vpop.f32.mrf.mxu0
    %v306 = vadd.f32 0.0, %v305
    %v307 = vpop.f32.mrf.mxu0
    %v308 = vpop.f32.mrf.mxu0
    %v309 = vpop.f32.mrf.mxu0
    %310 = vdwg.mxu0
    %vm311 = vcmask 130048
    %312 = vst.msk [vmem:[#allocation5] sm:$0xff] %vm311, %v306
    // Predicated region
    $region22: #{tpu_custom_call.1} parent=1 // pred_check
      _
    $region23: #{tpu_custom_call.1} parent=1 // pred_check_branch
      %314 = sbr.rel (0) target = $region25
    $region24: #{tpu_custom_call.1} parent=1 // pred_region
      %s316 = ssub.s32 128, 128
      %317 = vsyncadd [#allocation4], %s316
      %s319 = sshll.u32 [#allocation5], 4
      %s320 = int_to_ptr.vmem [resolvable:$true] %s319
      %322 = dma.vmem_to_hbm [thread:$0]  %s320, 128, %s4, [#allocation4]
    $region25: #{tpu_custom_call.1} parent=1 // pred_fallthru
      _
    // Predicated region
    $region26: #{tpu_custom_call.1} parent=1 // pred_check
      _
    $region27: #{tpu_custom_call.1} parent=1 // pred_check_branch
      %324 = sbr.rel (0) target = $region29
    $region28: #{tpu_custom_call.1} parent=1 // pred_region
      %325 = dma.done [#allocation4], 128
    $region29: #{tpu_custom_call.1} parent=1 // pred_fallthru
      _
    %326 = vsyncpa [#allocation3], 1
    %327 = vsyncpa [#allocation4], 1

</llo_original>
